<compile_context>
chip_gen: v7x
topology: tpu7x:2x2x1
jax: 0.10.0
libtpu: 0.0.40
codegen_flags: <defaults>
</compile_context>

<pallas_src>
import functools

import numpy as np
import jax
import jax.numpy as jnp
from jax.experimental import pallas as pl
from jax.experimental.pallas import tpu as pltpu


# ---------------------------------------------------------------------------
# helpers
# ---------------------------------------------------------------------------

def _round_up(v, m):
    return ((v + m - 1) // m) * m


def _tpu_budget():
    """Generation-aware budgets: (fused_slab_max, max_block_bytes, vmem_limit)."""
    kind = ""
    try:
        kind = jax.devices()[0].device_kind.lower()
    except Exception:
        pass
    if ("v7" not in kind) and any(t in kind for t in ("v4", "v5", "v6")):
        # 128 MiB physical VMEM generations.
        return 6 * 1024 * 1024, 6 * 1024 * 1024, 64 * 1024 * 1024
    # v7x (64 MiB physical) or unknown: stay conservative.
    return 4 * 1024 * 1024, 4 * 1024 * 1024, 48 * 1024 * 1024


def _choose_hw_tile(hw, c, itemsize, max_block_bytes):
    """Largest multiple-of-128 HW tile with C*tile*itemsize <= budget."""
    lane = 128
    cap = max(lane, (max_block_bytes // max(1, c * itemsize)) // lane * lane)
    return min(cap, _round_up(hw, lane))


def _gate_from_mix(mix, convw_ref, conv_sc, k_size):
    """Channel conv (k shifted MACs on zero-padded buffer) + sigmoid -> (C,1)."""
    c = mix.shape[0]
    pad = (k_size - 1) // 2
    conv_sc[...] = jnp.zeros_like(conv_sc)
    conv_sc[pad:pad + c, :] = mix
    y = jnp.zeros_like(mix)
    for t in range(k_size):                       # k is small & static
        y = y + convw_ref[t] * conv_sc[t:t + c, :]
    return 1.0 / (1.0 + jnp.exp(-y))


# ---------------------------------------------------------------------------
# fused single-pass kernel (whole (C, HW) batch slab resident in VMEM)
# ---------------------------------------------------------------------------

def _fused_kernel(w2_ref, convw_ref, x_ref, o_ref, conv_sc, *, hw_true, k_size):
    x = x_ref[...]                                    # (C, HW), resident slab
    xf = x.astype(jnp.float32)
    onesv = jnp.ones((xf.shape[1], 1), jnp.float32)
    n = jnp.float32(hw_true)
    denom = jnp.float32(max(hw_true - 1, 1))          # ddof=1; hw==1 clamped

    # MXU dots keep cross-lane reductions off the XLU (scarce on v6e/v7x);
    # the MXU is otherwise idle in this kernel.
    mean = jnp.dot(xf, onesv, preferred_element_type=jnp.float32) / n   # (C,1)
    diff = xf - mean                                  # centered (two-pass) var
    var = jnp.dot(diff * diff, onesv, preferred_element_type=jnp.float32) / denom
    std = jnp.sqrt(jnp.maximum(var, 0.0))

    w0 = w2_ref[0]                                    # sigmoid(weight)[0]
    w1 = w2_ref[1]
    mix = 0.5 * (mean + std) + w0 * mean + w1 * std   # (C, 1)

    gate = _gate_from_mix(mix, convw_ref, conv_sc, k_size)
    o_ref[...] = (x * gate.astype(x.dtype)).astype(o_ref.dtype)


# ---------------------------------------------------------------------------
# streamed two-pass kernels (fallback for large C * HW)
# ---------------------------------------------------------------------------

def _stats_gate_kernel(w2_ref, convw_ref, x_ref, gate_ref,
                       sum_sc, sumsq_sc, conv_sc, *, hw_true, tile, k_size):
    h = pl.program_id(1)

    @pl.when(h == 0)
    def _():
        sum_sc[...] = jnp.zeros_like(sum_sc)
        sumsq_sc[...] = jnp.zeros_like(sumsq_sc)

    xf = x_ref[...].astype(jnp.float32)               # (C, T)
    if hw_true % tile != 0:
        # Ragged last tile: OOB block reads return garbage -> zero the tail
        # columns before accumulating (zeros don't perturb sum / sumsq).
        col = jax.lax.broadcasted_iota(jnp.int32, xf.shape, 1)
        xf = jnp.where(col < (hw_true - h * tile), xf, 0.0)

    # MXU dots against a ones vector instead of XLU lane reductions.
    onesv = jnp.ones((xf.shape[1], 1), jnp.float32)
    sum_sc[...] += jnp.dot(xf, onesv, preferred_element_type=jnp.float32)
    sumsq_sc[...] += jnp.dot(xf * xf, onesv, preferred_element_type=jnp.float32)

    @pl.when(h == pl.num_programs(1) - 1)
    def _():
        n = jnp.float32(hw_true)
        denom = jnp.float32(max(hw_true - 1, 1))      # ddof=1; hw==1 clamped
        s = sum_sc[...]
        mean = s / n
        # Single-pass (sum/sumsq) variance for the streamed path; clamp
        # negative cancellation residue.  (Fused path uses centered form.)
        var = jnp.maximum((sumsq_sc[...] - s * mean) / denom, 0.0)
        std = jnp.sqrt(var)
        w0 = w2_ref[0]
        w1 = w2_ref[1]
        mix = 0.5 * (mean + std) + w0 * mean + w1 * std
        gate_ref[...] = _gate_from_mix(mix, convw_ref, conv_sc, k_size)


def _apply_kernel(gate_ref, x_ref, o_ref):
    """Pass 2: lane-dense elementwise x * gate in the input dtype."""
    x = x_ref[...]                                    # (C, T)
    g = gate_ref[...].astype(x.dtype)                 # (C, 1)
    o_ref[...] = (x * g).astype(o_ref.dtype)


# ---------------------------------------------------------------------------
# wrapper
# ---------------------------------------------------------------------------

def mca_gate(x, weight2, conv_w, k_size, *, force_streaming=False, tile_override=None):
    """x: (B, C, H, W). Returns (B, C, H, W). jit-safe in x / weight2 / conv_w."""
    assert k_size % 2 == 1, "k_size must be odd (matches PyTorch same-length conv)"
    B, C, H, W = x.shape
    hw = H * W
    itemsize = jnp.dtype(x.dtype).itemsize
    fused_max, max_block, vmem_limit = _tpu_budget()
    pad = (k_size - 1) // 2

    x3 = x.reshape(B, C, hw)
    # Tiny params -> SMEM scalars; sigmoid(weight) computed once (2 elements).
    w2s = jax.nn.sigmoid(weight2.astype(jnp.float32)).reshape(2)
    convw = jnp.asarray(conv_w, jnp.float32).reshape(k_size)

    slab_f32_bytes = C * hw * 4                       # in-kernel f32 working slab

    if (not force_streaming) and slab_f32_bytes <= fused_max:
        # ---- fused single pass: 1 HBM read + 1 HBM write of x ----
        y3 = pl.pallas_call(
            functools.partial(_fused_kernel, hw_true=hw, k_size=k_size),
            out_shape=jax.ShapeDtypeStruct((B, C, hw), x.dtype),
            grid=(B,),
            in_specs=[
                pl.BlockSpec(memory_space=pltpu.MemorySpace.SMEM),   # sigmoid(w)
                pl.BlockSpec(memory_space=pltpu.MemorySpace.SMEM),   # conv taps
                pl.BlockSpec((None, C, hw), lambda b: (b, 0, 0)),    # x slab
            ],
            out_specs=pl.BlockSpec((None, C, hw), lambda b: (b, 0, 0)),
            scratch_shapes=[pltpu.VMEM((C + 2 * pad, 1), jnp.float32)],
            compiler_params=pltpu.CompilerParams(
                dimension_semantics=("parallel",),
                vmem_limit_bytes=vmem_limit),
        )(w2s, convw, x3)
        return y3.reshape(B, C, H, W)

    # ---- streamed two-pass fallback ----
    tile = tile_override if tile_override is not None else _choose_hw_tile(
        hw, C, itemsize, max_block)
    n_hw = pl.cdiv(hw, tile)

    # pass 1: fused sum/sumsq stats + channel conv + sigmoid gate
    gate = pl.pallas_call(
        functools.partial(_stats_gate_kernel, hw_true=hw, tile=tile, k_size=k_size),
        out_shape=jax.ShapeDtypeStruct((B, C, 1), jnp.float32),
        grid=(B, n_hw),
        in_specs=[
            pl.BlockSpec(memory_space=pltpu.MemorySpace.SMEM),       # sigmoid(w)
            pl.BlockSpec(memory_space=pltpu.MemorySpace.SMEM),       # conv taps
            pl.BlockSpec((None, C, tile), lambda b, h: (b, 0, h)),   # x tile
        ],
        out_specs=pl.BlockSpec((None, C, 1), lambda b, h: (b, 0, 0)),
        scratch_shapes=[
            pltpu.VMEM((C, 1), jnp.float32),             # sum accumulator
            pltpu.VMEM((C, 1), jnp.float32),             # sumsq accumulator
            pltpu.VMEM((C + 2 * pad, 1), jnp.float32),   # zero-padded conv buffer
        ],
        compiler_params=pltpu.CompilerParams(
            dimension_semantics=("parallel", "arbitrary"),
            vmem_limit_bytes=vmem_limit),
    )(w2s, convw, x3)

    # pass 2: broadcast multiply, streamed with lane-dense tiles (ragged last
    # block handled by Pallas output clipping).
    y3 = pl.pallas_call(
        _apply_kernel,
        out_shape=jax.ShapeDtypeStruct((B, C, hw), x.dtype),
        grid=(B, n_hw),
        in_specs=[
            pl.BlockSpec((None, C, 1), lambda b, h: (b, 0, 0)),      # gate
            pl.BlockSpec((None, C, tile), lambda b, h: (b, 0, h)),   # x tile
        ],
        out_specs=pl.BlockSpec((None, C, tile), lambda b, h: (b, 0, h)),
        compiler_params=pltpu.CompilerParams(
            dimension_semantics=("parallel", "parallel"),
            vmem_limit_bytes=vmem_limit),
    )(gate, x3)

    return y3.reshape(B, C, H, W)


# ---------------------------------------------------------------------------
# plain-JAX reference (mirrors the PyTorch forward)
# ---------------------------------------------------------------------------

def mca_gate_reference(x, weight2, conv_w, k_size):
    B, C, H, W = x.shape
    xf = x.reshape(B, C, -1)
    avg = jnp.mean(xf, axis=-1)
    std = jnp.std(xf, axis=-1, ddof=1)
    ws = jax.nn.sigmoid(weight2)
    out = 0.5 * (avg + std) + ws[0] * avg + ws[1] * std
    pad = (k_size - 1) // 2
    padded = jnp.pad(out, ((0, 0), (pad, pad)))
    y = jnp.zeros_like(out)
    for t in range(k_size):
        y = y + conv_w[t] * padded[:, t:t + C]
    gate = jax.nn.sigmoid(y)
    return x * gate[:, :, None, None]


if __name__ == "__main__":
    k_size = 3
    key = jax.random.PRNGKey(0)
    kx, kw, kc, kx2 = jax.random.split(key, 4)

    # nn.Parameter(torch.rand(2)) -> uniform [0, 1)
    weight2 = jax.random.uniform(kw, (2,), dtype=jnp.float32)
    # Conv2d(1, 1, (1, k)) weight, flattened to (k,)
    conv_w = jax.random.normal(kc, (k_size,), dtype=jnp.float32) * 0.1

    # 1) fused single-pass path (small slab).
    B, C, H, W = 2, 4, 16, 16
    x = jax.random.normal(kx, (B, C, H, W), dtype=jnp.float32)
    y = jax.block_until_ready(mca_gate(x, weight2, conv_w, k_size))
    y_ref = mca_gate_reference(x, weight2, conv_w, k_size)
    np.testing.assert_allclose(np.asarray(y), np.asarray(y_ref),
                               rtol=2e-5, atol=2e-5)

    # 2) streamed two-pass path with a ragged HW tail (forced small config to
    #    exercise multi-tile accumulation, tail masking, and output clipping).
    B2, C2, H2, W2 = 2, 4, 13, 13
    x2 = jax.random.normal(kx2, (B2, C2, H2, W2), dtype=jnp.float32)
    y2 = jax.block_until_ready(
        mca_gate(x2, weight2, conv_w, k_size,
                 force_streaming=True, tile_override=128))
    y2_ref = mca_gate_reference(x2, weight2, conv_w, k_size)
    np.testing.assert_allclose(np.asarray(y2), np.asarray(y2_ref),
                               rtol=2e-5, atol=2e-5)

    print("KERNEL_OK")
</pallas_src>

<mosaic_0001>
module attributes {stable_mosaic.version = 11 : i64} {
  func.func @_fused_kernel(%arg0: i32, %arg1: memref<2xf32, #tpu.memory_space<smem>>, %arg2: memref<3xf32, #tpu.memory_space<smem>>, %arg3: memref<1x4x256xf32, #tpu.memory_space<vmem>>, %arg4: memref<1x4x256xf32, #tpu.memory_space<vmem>>, %arg5: memref<6x1xf32, #tpu.memory_space<vmem>>) attributes {dimension_semantics = [#tpu.dimension_semantics<parallel>], iteration_bounds = array<i64: 2>, scalar_prefetch = 0 : i64, scratch_operands = 1 : i64, tpu.core_type = #tpu.core_type<tc>, window_params = [{transform_indices = @transform_0, window_bounds = array<i64: 2>}, {transform_indices = @transform_1, window_bounds = array<i64: 3>}, {transform_indices = @transform_2, window_bounds = array<i64: 1, 4, 256>}, {transform_indices = @transform_3, window_bounds = array<i64: 1, 4, 256>}]} {
    %c0 = arith.constant 0 : index
    %c0_0 = arith.constant 0 : index
    %c0_1 = arith.constant 0 : index
    %0 = vector.load %arg3[%c0, %c0_0, %c0_1] : memref<1x4x256xf32, #tpu.memory_space<vmem>>, vector<1x4x256xf32>
    %1 = vector.shape_cast %0 : vector<1x4x256xf32> to vector<4x256xf32>
    %cst = arith.constant 1.000000e+00 : f32
    %2 = vector.broadcast %cst : f32 to vector<256x1xf32>
    %cst_2 = arith.constant dense<0.000000e+00> : vector<4x1xf32>
    %3 = tpu.matmul %1, %2, %cst_2 {dimension_numbers = #tpu.dot_dimension_numbers<[1], [0], [0], [1], [0, 0, 1, 1], [], []>} : vector<4x256xf32>, vector<256x1xf32>, vector<4x1xf32> -> vector<4x1xf32>
    %cst_3 = arith.constant 2.560000e+02 : f32
    %4 = vector.broadcast %cst_3 : f32 to vector<4x1xf32>
    %5 = arith.divf %3, %4 : vector<4x1xf32>
    %6 = vector.broadcast %5 : vector<4x1xf32> to vector<4x256xf32>
    %7 = arith.subf %1, %6 : vector<4x256xf32>
    %8 = arith.mulf %7, %7 : vector<4x256xf32>
    %cst_4 = arith.constant dense<0.000000e+00> : vector<4x1xf32>
    %9 = tpu.matmul %8, %2, %cst_4 {dimension_numbers = #tpu.dot_dimension_numbers<[1], [0], [0], [1], [0, 0, 1, 1], [], []>} : vector<4x256xf32>, vector<256x1xf32>, vector<4x1xf32> -> vector<4x1xf32>
    %cst_5 = arith.constant 2.550000e+02 : f32
    %10 = vector.broadcast %cst_5 : f32 to vector<4x1xf32>
    %11 = arith.divf %9, %10 : vector<4x1xf32>
    %cst_6 = arith.constant 0.000000e+00 : f32
    %12 = vector.broadcast %cst_6 : f32 to vector<4x1xf32>
    %13 = arith.maximumf %11, %12 : vector<4x1xf32>
    %14 = math.sqrt %13 : vector<4x1xf32>
    %c0_7 = arith.constant 0 : index
    %15 = memref.load %arg1[%c0_7] : memref<2xf32, #tpu.memory_space<smem>>
    %c1 = arith.constant 1 : index
    %16 = memref.load %arg1[%c1] : memref<2xf32, #tpu.memory_space<smem>>
    %17 = arith.addf %5, %14 : vector<4x1xf32>
    %cst_8 = arith.constant 5.000000e-01 : f32
    %18 = vector.broadcast %cst_8 : f32 to vector<4x1xf32>
    %19 = arith.mulf %18, %17 : vector<4x1xf32>
    %20 = vector.broadcast %15 : f32 to vector<4x1xf32>
    %21 = arith.mulf %20, %5 : vector<4x1xf32>
    %22 = arith.addf %19, %21 : vector<4x1xf32>
    %23 = vector.broadcast %16 : f32 to vector<4x1xf32>
    %24 = arith.mulf %23, %14 : vector<4x1xf32>
    %25 = arith.addf %22, %24 : vector<4x1xf32>
    %cst_9 = arith.constant 0.000000e+00 : f32
    %26 = vector.broadcast %cst_9 : f32 to vector<6x1xf32>
    %c0_10 = arith.constant 0 : index
    %c0_11 = arith.constant 0 : index
    %27 = vector.load %arg5[%c0_10, %c0_11] : memref<6x1xf32, #tpu.memory_space<vmem>>, vector<6x1xf32>
    tpu.vector_store %arg5[%c0_10, %c0_11], %26 {strides = array<i32>} : memref<6x1xf32, #tpu.memory_space<vmem>>, vector<6x1xf32>,
    %c1_12 = arith.constant 1 : index
    %c0_13 = arith.constant 0 : index
    %28 = vector.load %arg5[%c1_12, %c0_13] : memref<6x1xf32, #tpu.memory_space<vmem>>, vector<4x1xf32>
    tpu.vector_store %arg5[%c1_12, %c0_13], %25 {strides = array<i32>} : memref<6x1xf32, #tpu.memory_space<vmem>>, vector<4x1xf32>,
    %cst_14 = arith.constant 0.000000e+00 : f32
    %29 = vector.broadcast %cst_14 : f32 to vector<4x1xf32>
    %c0_15 = arith.constant 0 : index
    %30 = memref.load %arg2[%c0_15] : memref<3xf32, #tpu.memory_space<smem>>
    %c0_16 = arith.constant 0 : index
    %c0_17 = arith.constant 0 : index
    %31 = vector.load %arg5[%c0_16, %c0_17] : memref<6x1xf32, #tpu.memory_space<vmem>>, vector<4x1xf32>
    %32 = vector.broadcast %30 : f32 to vector<4x1xf32>
    %33 = arith.mulf %32, %31 : vector<4x1xf32>
    %34 = arith.addf %29, %33 : vector<4x1xf32>
    %c1_18 = arith.constant 1 : index
    %35 = memref.load %arg2[%c1_18] : memref<3xf32, #tpu.memory_space<smem>>
    %c1_19 = arith.constant 1 : index
    %c0_20 = arith.constant 0 : index
    %36 = vector.load %arg5[%c1_19, %c0_20] : memref<6x1xf32, #tpu.memory_space<vmem>>, vector<4x1xf32>
    %37 = vector.broadcast %35 : f32 to vector<4x1xf32>
    %38 = arith.mulf %37, %36 : vector<4x1xf32>
    %39 = arith.addf %34, %38 : vector<4x1xf32>
    %c2 = arith.constant 2 : index
    %40 = memref.load %arg2[%c2] : memref<3xf32, #tpu.memory_space<smem>>
    %c2_21 = arith.constant 2 : index
    %c0_22 = arith.constant 0 : index
    %41 = vector.load %arg5[%c2_21, %c0_22] : memref<6x1xf32, #tpu.memory_space<vmem>>, vector<4x1xf32>
    %42 = vector.broadcast %40 : f32 to vector<4x1xf32>
    %43 = arith.mulf %42, %41 : vector<4x1xf32>
    %44 = arith.addf %39, %43 : vector<4x1xf32>
    %cst_23 = arith.constant 0.000000e+00 : f32
    %45 = vector.broadcast %cst_23 : f32 to vector<4x1xf32>
    %46 = arith.subf %45, %44 : vector<4x1xf32>
    %47 = math.exp %46 : vector<4x1xf32>
    %cst_24 = arith.constant 1.000000e+00 : f32
    %48 = vector.broadcast %cst_24 : f32 to vector<4x1xf32>
    %49 = arith.addf %48, %47 : vector<4x1xf32>
    %cst_25 = arith.constant 1.000000e+00 : f32
    %50 = vector.broadcast %cst_25 : f32 to vector<4x1xf32>
    %51 = arith.divf %50, %49 : vector<4x1xf32>
    %52 = vector.broadcast %51 : vector<4x1xf32> to vector<4x256xf32>
    %53 = arith.mulf %1, %52 : vector<4x256xf32>
    %c0_26 = arith.constant 0 : index
    %c0_27 = arith.constant 0 : index
    %c0_28 = arith.constant 0 : index
    %54 = vector.load %arg4[%c0_26, %c0_27, %c0_28] : memref<1x4x256xf32, #tpu.memory_space<vmem>>, vector<1x4x256xf32>
    %55 = vector.shape_cast %54 : vector<1x4x256xf32> to vector<4x256xf32>
    %56 = vector.shape_cast %53 : vector<4x256xf32> to vector<1x4x256xf32>
    tpu.vector_store %arg4[%c0_26, %c0_27, %c0_28], %56 {strides = array<i32>} : memref<1x4x256xf32, #tpu.memory_space<vmem>>, vector<1x4x256xf32>,
    return
  }
  func.func @transform_0(%arg0: i32) -> i32 {
    %c0_i32 = arith.constant 0 : i32
    %c0_i32_0 = arith.constant 0 : i32
    return %c0_i32 : i32
  }
  func.func @transform_1(%arg0: i32) -> i32 {
    %c0_i32 = arith.constant 0 : i32
    %c0_i32_0 = arith.constant 0 : i32
    return %c0_i32 : i32
  }
  func.func @transform_2(%arg0: i32) -> (i32, i32, i32) {
    %c0_i32 = arith.constant 0 : i32
    %c0_i32_0 = arith.constant 0 : i32
    %c0_i32_1 = arith.constant 0 : i32
    return %arg0, %c0_i32, %c0_i32_0 : i32, i32, i32
  }
  func.func @transform_3(%arg0: i32) -> (i32, i32, i32) {
    %c0_i32 = arith.constant 0 : i32
    %c0_i32_0 = arith.constant 0 : i32
    %c0_i32_1 = arith.constant 0 : i32
    return %arg0, %c0_i32, %c0_i32_0 : i32, i32, i32
  }
}

</mosaic_0001>

<llo_original>
// kernel: tpu_custom_call.1
$region0: #{tpu_custom_call.1}
  #allocation0 [shape = 'u32[]', space=smem, size = 0x4, offset = 0x4, fixed_abs, tag = 'smem constant byte address 0x4 - core index']
  #allocation1 [shape = 'u32[144,128]{1,0:T(1,128)}', space=vmem, size = 0x12000, scoped, tag = 'internal scratch']
  #allocation2 [shape = 'f32[6,1]{1,0:T(8,128)}', space=vmem, size = 0x1000, scoped, tag = 'scratch operand']
  %s0 = inlined_call_operand.hbm [shape: f32[2], index: 0, kind: input, shape index: {}]
  %s1 = inlined_call_operand.vmem [shape: f32[3], index: 1, kind: input, shape index: {}]
  %s2 = inlined_call_operand.hbm [shape: f32[2,4,256], index: 2, kind: input, shape index: {}]
  %s3 = inlined_call_operand.hbm [shape: f32[2,4,256], index: 3, kind: output, shape index: {}]
  %s4 = sld [smem:[#allocation0]]
  $region57: #{tpu_custom_call.1} parent=0
    _
  %s6 = ssub.s32 1, %s4
  %s7 = scalar_select 0, %s6, %s4
  $region1: #{tpu_custom_call.1} parent=0
    #allocation3 [shape = 'u8[512]{0}', space=smem, size = 0x200, scoped, tag = 'input window, operand 0, single buffered']
    #allocation4 [shape = 's32[2]{0}', space=sflag, size = 0x8, scoped, tag = 'scoped memory for tpu_custom_call.1']
    #allocation5 [shape = 's32[2]{0}', space=sflag, size = 0x8, scoped, tag = 'scoped memory for tpu_custom_call.1']
    #allocation6 [shape = 's32[2]{0}', space=sflag, size = 0x8, scoped, tag = 'scoped memory for tpu_custom_call.1']
    #allocation7 [shape = 's32[2]{0}', space=sflag, size = 0x8, scoped, tag = 'scoped memory for tpu_custom_call.1']
    #allocation8 [shape = 'u8[512]{0}', space=smem, size = 0x200, scoped, tag = 'input window, operand 1, single buffered']
    #allocation9 [shape = 'u8[8192]{0}', space=vmem, size = 0x2000, scoped, tag = 'input window, operand 2']
    #allocation10 [shape = 'u8[8192]{0}', space=vmem, size = 0x2000, scoped, tag = 'output window, operand 0']
    %8 = vsyncpa [#allocation6], 0
    %9 = vsyncpa [#allocation7], 0
    %10 = vsyncpa [#allocation4], 0
    %s11 = scalar_lea.sflag [#allocation4], 1
    %12 = vsyncpa %s11, 0
    %13 = vsyncpa [#allocation5], 0
    %s14 = scalar_lea.sflag [#allocation5], 1
    %15 = vsyncpa %s14, 0
    loop: start=0, step=1, limit=4
    $region2: #{tpu_custom_call.1} parent=1 // loop_pre_header
      _
    $region3: #{tpu_custom_call.1} parent=1 // loop_header
      %s17 = sphi 0, %s21
      %p18 = scmp.ge.s32.totalorder %s17, 4
      %s25 = sphi 0, %s25
      %s27 = sphi 0, %s25
      %s28 = sphi 0, %s27
      %s42 = sphi 0, %s28
      %s46 = sphi 0, %s46
      %s48 = sphi 0, %s46
      %s49 = sphi 0, %s48
      %s63 = sphi 0, %s49
      %s69 = sphi 0, %s71
      %s72 = sphi 0, %s69
      %s73 = sphi 0, %s72
      %s89 = sphi 0, %s73
      %s95 = sphi 0, %s97
      %s98 = sphi 0, %s95
      %s99 = sphi 0, %s98
      %s115 = sphi 0, %s99
    $region4: #{tpu_custom_call.1} parent=1 // loop_header_branch
      %20 = sbr.rel (%p18) target = $region8
    $region5: #{tpu_custom_call.1} parent=1 // loop_body
      %s22 = ssub.s32 %s17, 1
      %s23 = ssub.s32 %s17, 2
      %s24 = sadd.s32 %s17, 1
      %s26 = sadd.s32 %s25, 1
      %p29 = scmp.eq.s32.totalorder %s17, 1
      %p30 = scmp.ne.s32.totalorder %s25, %s27
      %p31 = scmp.eq.s32.totalorder %s17, 0
      %p32 = por %p30, %p31
      %p33 = scmp.ne.s32.totalorder %s25, %s27
      %p34 = scmp.eq.s32.totalorder %s22, 1
      %p35 = por %p33, %p34
      %p36 = scmp.ne.s32.totalorder %s27, %s28
      %p37 = scmp.eq.s32.totalorder %s22, 0
      %p38 = por %p36, %p37
      %p39 = scmp.ne.s32.totalorder %s27, %s28
      %p40 = scmp.eq.s32.totalorder %s23, 1
      %p41 = por %p39, %p40
      %p43 = scmp.ne.s32.totalorder %s28, %s42
      %p44 = scmp.eq.s32.totalorder %s23, 0
      %p45 = por %p43, %p44
      %s47 = sadd.s32 %s46, 1
      %p50 = scmp.eq.s32.totalorder %s17, 1
      %p51 = scmp.ne.s32.totalorder %s46, %s48
      %p52 = scmp.eq.s32.totalorder %s17, 0
      %p53 = por %p51, %p52
      %p54 = scmp.ne.s32.totalorder %s46, %s48
      %p55 = scmp.eq.s32.totalorder %s22, 1
      %p56 = por %p54, %p55
      %p57 = scmp.ne.s32.totalorder %s48, %s49
      %p58 = scmp.eq.s32.totalorder %s22, 0
      %p59 = por %p57, %p58
      %p60 = scmp.ne.s32.totalorder %s48, %s49
      %p61 = scmp.eq.s32.totalorder %s23, 1
      %p62 = por %p60, %p61
      %p64 = scmp.ne.s32.totalorder %s49, %s63
      %p65 = scmp.eq.s32.totalorder %s23, 0
      %p66 = por %p64, %p65
      %s67 = ssub.s32 %s17, %s24
      %p68 = scmp.eq.s32.totalorder %s67, 0
      %s70 = sadd.s32 %s69, 1
      %s71 = scalar_select %p68, %s69, %s70
      %p74 = pneg %p68
      %p75 = scmp.eq.s32.totalorder %s17, 1
      %p76 = por %p74, %p75
      %p77 = scmp.ne.s32.totalorder %s69, %s72
      %p78 = scmp.eq.s32.totalorder %s17, 0
      %p79 = por %p77, %p78
      %p80 = scmp.ne.s32.totalorder %s69, %s72
      %p81 = scmp.eq.s32.totalorder %s22, 1
      %p82 = por %p80, %p81
      %p83 = scmp.ne.s32.totalorder %s72, %s73
      %p84 = scmp.eq.s32.totalorder %s22, 0
      %p85 = por %p83, %p84
      %p86 = scmp.ne.s32.totalorder %s72, %s73
      %p87 = scmp.eq.s32.totalorder %s23, 1
      %p88 = por %p86, %p87
      %p90 = scmp.ne.s32.totalorder %s73, %s89
      %p91 = scmp.eq.s32.totalorder %s23, 0
      %p92 = por %p90, %p91
      %s93 = ssub.s32 %s17, %s24
      %p94 = scmp.eq.s32.totalorder %s93, 0
      %s96 = sadd.s32 %s95, 1
      %s97 = scalar_select %p94, %s95, %s96
      %p100 = pneg %p94
      %p101 = scmp.eq.s32.totalorder %s17, 1
      %p102 = por %p100, %p101
      %p103 = scmp.ne.s32.totalorder %s95, %s98
      %p104 = scmp.eq.s32.totalorder %s17, 0
      %p105 = por %p103, %p104
      %p106 = scmp.ne.s32.totalorder %s95, %s98
      %p107 = scmp.eq.s32.totalorder %s22, 1
      %p108 = por %p106, %p107
      %p109 = scmp.ne.s32.totalorder %s98, %s99
      %p110 = scmp.eq.s32.totalorder %s22, 0
      %p111 = por %p109, %p110
      %p112 = scmp.ne.s32.totalorder %s98, %s99
      %p113 = scmp.eq.s32.totalorder %s23, 1
      %p114 = por %p112, %p113
      %p116 = scmp.ne.s32.totalorder %s99, %s115
      %p117 = scmp.eq.s32.totalorder %s23, 0
      %p118 = por %p116, %p117
      %p119 = scmp.le.s32.totalorder 1, %s17
      %p120 = scmp.lt.s32.totalorder %s17, 3
      %p121 = pnand %p119, %p120
      %p122 = pneg %p121
      // Predicated region
      $region9: #{tpu_custom_call.1} parent=5 // pred_check
        _
      $region10: #{tpu_custom_call.1} parent=5 // pred_check_branch
        %124 = sbr.rel (%p121) target = $region12
      $region11: #{tpu_custom_call.1} parent=5 // pred_region
        %s125 = ssub.s32 %s17, 1
        // Predicated region
        $region13: #{tpu_custom_call.1} parent=11 // pred_check
          %p126 = pneg %p38
        $region14: #{tpu_custom_call.1} parent=11 // pred_check_branch
          %128 = sbr.rel (%p126) target = $region16
        $region15: #{tpu_custom_call.1} parent=11 // pred_region
          %s130 = ssub.s32 16, 16
          %131 = vsyncadd [#allocation6], %s130
          %134 = dma.hbm_to_smem %s0, 16, [#allocation3], [#allocation6]
        $region16: #{tpu_custom_call.1} parent=11 // pred_fallthru
          _
        // Predicated region
        $region17: #{tpu_custom_call.1} parent=11 // pred_check
          %p135 = pneg %p59
        $region18: #{tpu_custom_call.1} parent=11 // pred_check_branch
          %137 = sbr.rel (%p135) target = $region20
        $region19: #{tpu_custom_call.1} parent=11 // pred_region
          %s139 = ssub.s32 16, 16
          %140 = vsyncadd [#allocation7], %s139
          %s142 = sshll.u32 %s1, 4
          %s143 = int_to_ptr.vmem [resolvable:$true] %s142
          %145 = dma.vmem_to_smem %s143, 16, [#allocation8], [#allocation7]
        $region20: #{tpu_custom_call.1} parent=11 // pred_fallthru
          _
      $region12: #{tpu_custom_call.1} parent=5 // pred_fallthru
        _
      %p146 = scmp.lt.s32.totalorder %s17, 2
      // Predicated region
      $region21: #{tpu_custom_call.1} parent=5 // pred_check
        %p147 = pneg %p146
      $region22: #{tpu_custom_call.1} parent=5 // pred_check_branch
        %149 = sbr.rel (%p147) target = $region24
      $region23: #{tpu_custom_call.1} parent=5 // pred_region
        // Predicated region
        $region25: #{tpu_custom_call.1} parent=23 // pred_check
          %p150 = pneg %p79
        $region26: #{tpu_custom_call.1} parent=23 // pred_check_branch
          %152 = sbr.rel (%p150) target = $region28
        $region27: #{tpu_custom_call.1} parent=23 // pred_region
          %s153 = sand.u32 %s69, 1
          %s154 = scalar_lea.sflag [#allocation4], %s153
          %s155 = sand.u32 %s69, 1
          %s156 = smul.addr %s155, 8
          %s157 = scalar_lea.vmem [#allocation9], %s156
          %s159 = ssub.s32 128, 128
          %160 = vsyncadd %s154, %s159
          %s161 = smul.addr %s17, 2
          %s162 = smul.addr %s161, 64
          %s163 = scalar_lea.hbm %s2, %s162
          %s165 = sshll.u32 %s157, 4
          %s166 = int_to_ptr.vmem [resolvable:$true] %s165
          %168 = dma.hbm_to_vmem [thread:$0]  %s163, 128, %s166, %s154
        $region28: #{tpu_custom_call.1} parent=23 // pred_fallthru
          _
      $region24: #{tpu_custom_call.1} parent=5 // pred_fallthru
        _
      %p169 = scmp.le.s32.totalorder 1, %s17
      %p170 = scmp.lt.s32.totalorder %s17, 3
      %p171 = pnand %p169, %p170
      %p172 = pneg %p171
      // Predicated region
      $region29: #{tpu_custom_call.1} parent=5 // pred_check
        _
      $region30: #{tpu_custom_call.1} parent=5 // pred_check_branch
        %174 = sbr.rel (%p171) target = $region32
      $region31: #{tpu_custom_call.1} parent=5 // pred_region
        %s175 = ssub.s32 %s17, 1
        // Predicated region
        $region33: #{tpu_custom_call.1} parent=31 // pred_check
          %p176 = pneg %p38
        $region34: #{tpu_custom_call.1} parent=31 // pred_check_branch
          %178 = sbr.rel (%p176) target = $region36
        $region35: #{tpu_custom_call.1} parent=31 // pred_region
          %179 = dma.done [#allocation6], 16
        $region36: #{tpu_custom_call.1} parent=31 // pred_fallthru
          _
        // Predicated region
        $region37: #{tpu_custom_call.1} parent=31 // pred_check
          %p180 = pneg %p59
        $region38: #{tpu_custom_call.1} parent=31 // pred_check_branch
          %182 = sbr.rel (%p180) target = $region40
        $region39: #{tpu_custom_call.1} parent=31 // pred_region
          %183 = dma.done [#allocation7], 16
        $region40: #{tpu_custom_call.1} parent=31 // pred_fallthru
          _
        %s184 = sand.u32 %s72, 1
        %s185 = scalar_lea.sflag [#allocation4], %s184
        %s186 = sand.u32 %s72, 1
        %s187 = smul.addr %s186, 8
        %s188 = scalar_lea.vmem [#allocation9], %s187
        // Predicated region
        $region41: #{tpu_custom_call.1} parent=31 // pred_check
          %p189 = pneg %p85
        $region42: #{tpu_custom_call.1} parent=31 // pred_check_branch
          %191 = sbr.rel (%p189) target = $region44
        $region43: #{tpu_custom_call.1} parent=31 // pred_region
          %192 = dma.done %s185, 128
        $region44: #{tpu_custom_call.1} parent=31 // pred_fallthru
          _
        %193 = sfence
        %p194 = pneg %p38
        %p195 = pneg %p35
        %p196 = pneg %p59
        %p197 = pneg %p56
        %s198 = sand.u32 %s72, 1
        %s199 = scalar_lea.sflag [#allocation4], %s198
        %s200 = sand.u32 %s72, 1
        %s201 = smul.addr %s200, 8
        %s202 = scalar_lea.vmem [#allocation9], %s201
        %p203 = pneg %p85
        %p204 = pneg %p82
        %p205 = pneg %p111
        %p206 = pneg %p108
        %s207 = sand.u32 %s98, 1
        %s208 = scalar_lea.sflag [#allocation5], %s207
        %s209 = sand.u32 %s98, 1
        %s210 = smul.addr %s209, 8
        %s211 = scalar_lea.vmem [#allocation10], %s210
        %v212 = vld [vmem:[%s188] sm:$0xff]
        %v214 = vcombine.high %v212, %v212
        %216 = vmatprep.subr.mxu0 0.0
        %217 = vmatpush1.msra.mxu0 1.0
        %218 = vmatprep.subr.mxu0 0.0
        %219 = vmatpush1.msra.mxu0 1.0
        %220 = vmatprep.subr.mxu0 0.0
        %221 = vmatpush1.msra.mxu0 1.0
        %222 = vmatprep.subr.mxu0 0.0
        %223 = vmatpush1.msra.mxu0 1.0
        %224 = vmatprep.subr.mxu0 0.0
        %225 = vmatpush1.msra.mxu0 1.0
        %226 = vmatprep.subr.mxu0 0.0
        %227 = vmatpush1.msra.mxu0 1.0
        %228 = vmatprep.subr.mxu0 0.0
        %229 = vmatpush1.msra.mxu0 1.0
        %230 = vmatprep.subr.mxu0 0.0
        %231 = vmatpush1.msra.mxu0 1.0
        %232 = vmatprep.subr.mxu0 0.0
        %233 = vmatpush1.msra.mxu0 1.0
        %234 = vmatprep.subr.mxu0 0.0
        %235 = vmatpush1.msra.mxu0 1.0
        %236 = vmatprep.subr.mxu0 0.0
        %237 = vmatpush1.msra.mxu0 1.0
        %238 = vmatprep.subr.mxu0 0.0
        %239 = vmatpush1.msra.mxu0 1.0
        %240 = vmatprep.subr.mxu0 0.0
        %241 = vmatpush1.msra.mxu0 1.0
        %242 = vmatprep.subr.mxu0 0.0
        %243 = vmatpush1.msra.mxu0 1.0
        %244 = vmatprep.subr.mxu0 0.0
        %245 = vmatpush1.msra.mxu0 1.0
        %246 = vmatprep.subr.mxu0 0.0
        %247 = vmatpush1.msra.mxu0 1.0
        %248 = vmatprep.subr.mxu0 0.0
        %249 = vmatpush1.msra.mxu0 1.0
        %250 = vmatprep.subr.mxu0 0.0
        %251 = vmatpush1.msra.mxu0 1.0
        %252 = vmatprep.subr.mxu0 0.0
        %253 = vmatpush1.msra.mxu0 1.0
        %254 = vmatprep.subr.mxu0 0.0
        %255 = vmatpush1.msra.mxu0 1.0
        %256 = vmatprep.subr.mxu0 0.0
        %257 = vmatpush1.msra.mxu0 1.0
        %258 = vmatprep.subr.mxu0 0.0
        %259 = vmatpush1.msra.mxu0 1.0
        %260 = vmatprep.subr.mxu0 0.0
        %261 = vmatpush1.msra.mxu0 1.0
        %262 = vmatprep.subr.mxu0 0.0
        %263 = vmatpush1.msra.mxu0 1.0
        %264 = vmatprep.subr.mxu0 0.0
        %265 = vmatpush1.msra.mxu0 1.0
        %266 = vmatprep.subr.mxu0 0.0
        %267 = vmatpush1.msra.mxu0 1.0
        %268 = vmatprep.subr.mxu0 0.0
        %269 = vmatpush1.msra.mxu0 1.0
        %270 = vmatprep.subr.mxu0 0.0
        %271 = vmatpush1.msra.mxu0 1.0
        %272 = vmatprep.subr.mxu0 0.0
        %273 = vmatpush1.msra.mxu0 1.0
        %274 = vmatprep.subr.mxu0 0.0
        %275 = vmatpush1.msra.mxu0 1.0
        %276 = vmatprep.subr.mxu0 0.0
        %277 = vmatpush1.msra.mxu0 1.0
        %278 = vmatprep.subr.mxu0 0.0
        %279 = vmatpush1.msra.mxu0 1.0
        %280 = vmatprep.mubr.f32.mxu0 %v214
        %281 = vmatmul.mubr.f32.gmra.mrb[0].mxu0 %v212
        %v282 = vpop.f32.mrb[0].mxu0
        %v283 = vadd.f32 0.0, %v282
        %v284 = vpop.f32.mrb[0].mxu0
        %285 = vdwg.mxu0
        %v286 = vrcp.pop 256.0
        %v287 = vmul.f32 %v283, %v286
        %289 = vset.pattern.permute.xlu0 0
        %290 = vperm.xlu0 %289, %v287
        %v291 = vpop.permute.xlu0 %290
        %v293 = vunpack.c.l.s4 839922192
        %v294 = vunpack.c.0.s8 %v293
        %v295 = vlaneseq
        %v296 = vshrl.u32 %v295, 7
        %v297 = vsub.s32 %v294, %v296
        %v298 = vrot.slane %v291, %v297
        %v300 = vsub.f32 %v212, %v298
        %v301 = vmul.f32 %v300, %v300
        %v303 = vcombine.high %v301, %v301
        %305 = vmatprep.subr.mxu0 0.0
        %306 = vmatpush1.msra.mxu0 1.0
        %307 = vmatprep.subr.mxu0 0.0
        %308 = vmatpush1.msra.mxu0 1.0
        %309 = vmatprep.subr.mxu0 0.0
        %310 = vmatpush1.msra.mxu0 1.0
        %311 = vmatprep.subr.mxu0 0.0
        %312 = vmatpush1.msra.mxu0 1.0
        %313 = vmatprep.subr.mxu0 0.0
        %314 = vmatpush1.msra.mxu0 1.0
        %315 = vmatprep.subr.mxu0 0.0
        %316 = vmatpush1.msra.mxu0 1.0
        %317 = vmatprep.subr.mxu0 0.0
        %318 = vmatpush1.msra.mxu0 1.0
        %319 = vmatprep.subr.mxu0 0.0
        %320 = vmatpush1.msra.mxu0 1.0
        %321 = vmatprep.subr.mxu0 0.0
        %322 = vmatpush1.msra.mxu0 1.0
        %323 = vmatprep.subr.mxu0 0.0
        %324 = vmatpush1.msra.mxu0 1.0
        %325 = vmatprep.subr.mxu0 0.0
        %326 = vmatpush1.msra.mxu0 1.0
        %327 = vmatprep.subr.mxu0 0.0
        %328 = vmatpush1.msra.mxu0 1.0
        %329 = vmatprep.subr.mxu0 0.0
        %330 = vmatpush1.msra.mxu0 1.0
        %331 = vmatprep.subr.mxu0 0.0
        %332 = vmatpush1.msra.mxu0 1.0
        %333 = vmatprep.subr.mxu0 0.0
        %334 = vmatpush1.msra.mxu0 1.0
        %335 = vmatprep.subr.mxu0 0.0
        %336 = vmatpush1.msra.mxu0 1.0
        %337 = vmatprep.subr.mxu0 0.0
        %338 = vmatpush1.msra.mxu0 1.0
        %339 = vmatprep.subr.mxu0 0.0
        %340 = vmatpush1.msra.mxu0 1.0
        %341 = vmatprep.subr.mxu0 0.0
        %342 = vmatpush1.msra.mxu0 1.0
        %343 = vmatprep.subr.mxu0 0.0
        %344 = vmatpush1.msra.mxu0 1.0
        %345 = vmatprep.subr.mxu0 0.0
        %346 = vmatpush1.msra.mxu0 1.0
        %347 = vmatprep.subr.mxu0 0.0
        %348 = vmatpush1.msra.mxu0 1.0
        %349 = vmatprep.subr.mxu0 0.0
        %350 = vmatpush1.msra.mxu0 1.0
        %351 = vmatprep.subr.mxu0 0.0
        %352 = vmatpush1.msra.mxu0 1.0
        %353 = vmatprep.subr.mxu0 0.0
        %354 = vmatpush1.msra.mxu0 1.0
        %355 = vmatprep.subr.mxu0 0.0
        %356 = vmatpush1.msra.mxu0 1.0
        %357 = vmatprep.subr.mxu0 0.0
        %358 = vmatpush1.msra.mxu0 1.0
        %359 = vmatprep.subr.mxu0 0.0
        %360 = vmatpush1.msra.mxu0 1.0
        %361 = vmatprep.subr.mxu0 0.0
        %362 = vmatpush1.msra.mxu0 1.0
        %363 = vmatprep.subr.mxu0 0.0
        %364 = vmatpush1.msra.mxu0 1.0
        %365 = vmatprep.subr.mxu0 0.0
        %366 = vmatpush1.msra.mxu0 1.0
        %367 = vmatprep.subr.mxu0 0.0
        %368 = vmatpush1.msra.mxu0 1.0
        %369 = vmatprep.mubr.f32.mxu0 %v303
        %370 = vmatmul.mubr.f32.gmra.mrb[0].mxu0 %v301
        %v371 = vpop.f32.mrb[0].mxu0
        %v372 = vadd.f32 0.0, %v371
        %v373 = vpop.f32.mrb[0].mxu0
        %374 = vdwg.mxu0
        %v375 = vrcp.pop 255.0
        %v376 = vmul.f32 %v372, %v375
        %v377 = vmax.f32 %v376, 0.0
        %v378 = vrsqrt.pop %v377
        %v379 = vmul.f32 %v377, %v378
        %vm380 = vcmp.eq.f32.partialorder %v377, inf
        %v381 = vsel %vm380, %v377, %v379
        %vm382 = vcmp.eq.f32.partialorder %v377, 0.0
        %v383 = vand.u32 %v377, 2147483648
        %v384 = vsel %vm382, %v383, %v381
        %s385 = sld [smem:[#allocation3]]
        %s386 = sld [smem:[#allocation3 + $0x1]]
        %v387 = vadd.f32 %v287, %v384
        %v388 = vmul.f32 %v387, 0.5
        %v389 = vstv %s385
        %v390 = vmul.f32 %v389, %v287
        %v391 = vadd.f32 %v388, %v390
        %v392 = vstv %s386
        %v393 = vmul.f32 %v392, %v384
        %v394 = vadd.f32 %v391, %v393
        %vm395 = vcmask 5120
        %396 = vst.msk [vmem:[#allocation2] sm:$0x3f] %vm395, 0.0
        %vm397 = vcmask 3072
        %398 = vst.msk [vmem:[#allocation2 + $0x1] sm:$0xf] %vm397, %v394
        %s399 = sld [smem:[#allocation8]]
        %v400 = vld [vmem:[#allocation2] sm:$0xf]
        %v401 = vstv %s399
        %v402 = vmul.f32 %v401, %v400
        %v403 = vadd.f32 %v402, 0.0
        %s404 = sld [smem:[#allocation8 + $0x1]]
        %v405 = vld [vmem:[#allocation2 + $0x1] sm:$0xf]
        %v406 = vstv %s404
        %v407 = vmul.f32 %v406, %v405
        %v408 = vadd.f32 %v403, %v407
        %s409 = sld [smem:[#allocation8 + $0x2]]
        %v410 = vld [vmem:[#allocation2 + $0x2] sm:$0xf]
        %v411 = vstv %s409
        %v412 = vmul.f32 %v411, %v410
        %v413 = vadd.f32 %v408, %v412
        %v414 = vsub.f32 0.0, %v413
        %v415 = vmul.f32 %v414, 1.442695
        %v416 = vpow.pop %v415
        %v417 = vadd.f32 %v416, 1.0
        %v418 = vrcp.pop %v417
        %v419 = vmul.f32 1.0, %v418
        %421 = vset.pattern.permute.xlu0 0
        %422 = vperm.xlu0 %421, %v419
        %v423 = vpop.permute.xlu0 %422
        %v425 = vunpack.c.l.s4 839922192
        %v426 = vunpack.c.0.s8 %v425
        %v427 = vlaneseq
        %v428 = vshrl.u32 %v427, 7
        %v429 = vsub.s32 %v426, %v428
        %v430 = vrot.slane %v423, %v429
        %v432 = vmul.f32 %v212, %v430
        %433 = vst [vmem:[%s211] sm:$0xff] %v432
        %s434 = sand.u32 %s98, 1
        %s435 = scalar_lea.sflag [#allocation5], %s434
        %s436 = sand.u32 %s98, 1
        %s437 = smul.addr %s436, 8
        %s438 = scalar_lea.vmem [#allocation10], %s437
        // Predicated region
        $region45: #{tpu_custom_call.1} parent=31 // pred_check
          %p439 = pneg %p108
        $region46: #{tpu_custom_call.1} parent=31 // pred_check_branch
          %441 = sbr.rel (%p439) target = $region48
        $region47: #{tpu_custom_call.1} parent=31 // pred_region
          %s443 = ssub.s32 128, 128
          %444 = vsyncadd %s435, %s443
          %s445 = smul.addr %s22, 2
          %s446 = smul.addr %s445, 64
          %s447 = scalar_lea.hbm %s3, %s446
          %s449 = sshll.u32 %s438, 4
          %s450 = int_to_ptr.vmem [resolvable:$true] %s449
          %452 = dma.vmem_to_hbm [thread:$0]  %s450, 128, %s447, %s435
        $region48: #{tpu_custom_call.1} parent=31 // pred_fallthru
          _
      $region32: #{tpu_custom_call.1} parent=5 // pred_fallthru
        _
      %p453 = scmp.le.s32.totalorder 2, %s17
      // Predicated region
      $region49: #{tpu_custom_call.1} parent=5 // pred_check
        %p454 = pneg %p453
      $region50: #{tpu_custom_call.1} parent=5 // pred_check_branch
        %456 = sbr.rel (%p454) target = $region52
      $region51: #{tpu_custom_call.1} parent=5 // pred_region
        %s457 = ssub.s32 %s17, 2
        // Predicated region
        $region53: #{tpu_custom_call.1} parent=51 // pred_check
          %p458 = pneg %p114
        $region54: #{tpu_custom_call.1} parent=51 // pred_check_branch
          %460 = sbr.rel (%p458) target = $region56
        $region55: #{tpu_custom_call.1} parent=51 // pred_region
          %s461 = sand.u32 %s99, 1
          %s462 = scalar_lea.sflag [#allocation5], %s461
          %s463 = sand.u32 %s99, 1
          %s464 = smul.addr %s463, 8
          %s465 = scalar_lea.vmem [#allocation10], %s464
          %466 = dma.done %s462, 128
        $region56: #{tpu_custom_call.1} parent=51 // pred_fallthru
          _
      $region52: #{tpu_custom_call.1} parent=5 // pred_fallthru
        _
    $region6: #{tpu_custom_call.1} parent=1 // loop_footer
      %s21 = sadd.s32 1, %s17
    $region7: #{tpu_custom_call.1} parent=1 // loop_footer_branch
      %16 = sbr.rel target = $region3
    $region8: #{tpu_custom_call.1} parent=1 // loop_exit
      _
    %467 = vsyncpa [#allocation4], 1
    %s468 = scalar_lea.sflag [#allocation4], 1
    %469 = vsyncpa %s468, 1
    %470 = vsyncpa [#allocation5], 1
    %s471 = scalar_lea.sflag [#allocation5], 1
    %472 = vsyncpa %s471, 1
    %473 = vsyncpa [#allocation6], 1
    %s474 = scalar_lea.sflag [#allocation6], 1
    %475 = vsyncpa %s474, 1
    %476 = vsyncpa [#allocation7], 1
    %s477 = scalar_lea.sflag [#allocation7], 1
    %478 = vsyncpa %s477, 1

</llo_original>
